<compile_context>
chip_gen: v7x
topology: tpu7x:2x2x1
jax: 0.10.0
libtpu: 0.0.40
codegen_flags: <defaults>
</compile_context>

<pallas_src>
import functools

import jax
import jax.numpy as jnp
from jax import lax
from jax.experimental import pallas as pl
from jax.experimental.pallas import tpu as pltpu

_LANE = 128


def _mask_dice_kernel(flag_ref, lab_ref, out_ref, res_ref,
                      acc_i_ref, acc_l_ref, acc_o_ref,
                      *, n_eff, tile, tiles_per_core, b_eff, n_chunks, unroll):
    """Streaming masked-dice reductions.

    flag_ref : (B_eff, 1)       labels[:, 0], replicated per folded row (resident)
    lab_ref  : (B_eff, tile)    lane tile of the (B_eff, N_eff) label view
    out_ref  : (B_eff, tile)    lane tile of the (B_eff, N_eff) prediction view
    res_ref  : (1, 8, 128)      per-core lane-dense result: [inter, lsum, osum, ...]
    acc_*    : (B_eff, 128)     f32 lane-resident partial sums (VMEM scratch)
    """
    c = pl.program_id(0)                 # core (lane-range) index
    j = pl.program_id(1)                 # lane-tile index within this core
    last_j = pl.num_programs(1) - 1
    t = c * tiles_per_core + j           # logical global lane-tile index (may be OOB)
    col0 = t * tile                      # first global column covered by this step

    @pl.when(j == 0)
    def _init():
        acc_i_ref[...] = jnp.zeros_like(acc_i_ref)
        acc_l_ref[...] = jnp.zeros_like(acc_l_ref)
        acc_o_ref[...] = jnp.zeros_like(acc_o_ref)

    def accumulate(masked):
        # Chunked loads: cast / multiply / add one aligned 128-lane column group
        # at a time, carried in registers; a single VMEM RMW per grid step.
        def body(i, carry):
            acc_i, acc_l, acc_o = carry
            start = pl.multiple_of(i * _LANE, _LANE)
            lab_c = lab_ref[:, pl.ds(start, _LANE)].astype(jnp.float32)
            out_c = out_ref[:, pl.ds(start, _LANE)].astype(jnp.float32)
            if masked:
                lane = lax.broadcasted_iota(jnp.int32, (1, _LANE), 1)
                valid = (col0 + i * _LANE + lane) < n_eff
                lab_c = jnp.where(valid, lab_c, 0.0)
                out_c = jnp.where(valid, out_c, 0.0)
            return (acc_i + lab_c * out_c, acc_l + lab_c, acc_o + out_c)

        zeros = jnp.zeros((b_eff, _LANE), jnp.float32)
        acc_i, acc_l, acc_o = lax.fori_loop(
            0, n_chunks, body, (zeros, zeros, zeros), unroll=unroll)
        acc_i_ref[...] += acc_i
        acc_l_ref[...] += acc_l
        acc_o_ref[...] += acc_o

    fully_valid = (col0 + tile) <= n_eff

    @pl.when(fully_valid)
    def _fast():
        accumulate(masked=False)

    @pl.when(jnp.logical_not(fully_valid))
    def _ragged_or_duplicate():
        # Ragged tail or clamped duplicate tile (t >= n_tiles): lane-mask both
        # operands, so padding / repeated data contributes exactly zero.
        accumulate(masked=True)

    @pl.when(j == last_j)
    def _finalize():
        # Per-sample supervision mask applied once to the lane partials, then a
        # single set of cross-lane (XLU) reductions and one lane-dense write.
        row_mask = (flag_ref[...] >= 0).astype(jnp.float32)         # (B_eff, 1)
        inter = jnp.sum(row_mask * acc_i_ref[...])
        lsum = jnp.sum(row_mask * acc_l_ref[...])
        osum = jnp.sum(row_mask * acc_o_ref[...])
        lane = lax.broadcasted_iota(jnp.int32, (1, 8, _LANE), 2)
        res_ref[...] = (jnp.where(lane == 0, inter, 0.0)
                        + jnp.where(lane == 1, lsum, 0.0)
                        + jnp.where(lane == 2, osum, 0.0))


def _vmem_capacity_bytes():
    try:
        return int(pltpu.get_tpu_info().vmem_capacity_bytes)
    except Exception:
        return 128 * 1024 * 1024          # v5e/v6e physical VMEM fallback


def mask_dice_loss(out, labels, *, tile_n=None):
    """(loss, nbsup) matching MaskDiceLoss.forward."""
    B = out.shape[0]
    out_flat = out.reshape(B, -1)
    lab_flat = labels.reshape(B, -1)
    N = out_flat.shape[1]
    assert lab_flat.shape[1] == N, "labels/out feature sizes must match"

    # Supervision flags / nbsup in plain JAX: exact integer, no float round-trip.
    flags_b = lab_flat[:, :1]                                   # (B, 1)
    nbsup = jnp.sum((flags_b[:, 0] >= 0).astype(jnp.int32))

    # Fill sublanes: view (B, N) as (B*r, N/r), keeping B_eff small enough that
    # the register-resident (B_eff, 128) partials never spill (<= 64 rows).
    r = next(f for f in (8, 4, 2, 1) if N % f == 0 and (B * f <= 64 or f == 1))
    B_eff, N_eff = B * r, N // r
    out2 = out_flat.reshape(B_eff, N_eff)          # free row-major reshapes
    lab2 = lab_flat.reshape(B_eff, N_eff)          # native dtype kept in HBM
    flag = jnp.repeat(flags_b, r, axis=0)          # (B_eff, 1)

    s_lab = jnp.dtype(lab2.dtype).itemsize
    s_out = jnp.dtype(out2.dtype).itemsize
    s_flag = jnp.dtype(flag.dtype).itemsize

    # ---- VMEM-aware lane-tile sizing (scratch + flags + 2x buffering included).
    cap = _vmem_capacity_bytes()
    budget = min(cap // 3, 48 * 1024 * 1024)       # ~42 MiB v5e/v6e, ~21 MiB v7x
    fixed = 3 * B_eff * _LANE * 4                  # f32 accumulator scratch
    fixed += 2 * B_eff * _LANE * s_flag            # flag block (lane-padded, 2 bufs)
    fixed += 2 * 2 * 8 * _LANE * 4                 # (n_cores, 8, 128) f32 output
    margin = 2 * 1024 * 1024                       # Mosaic internal scratch headroom
    if tile_n is None:
        tile_n = (budget - fixed - margin) // (2 * B_eff * (s_lab + s_out))
    tile = max(_LANE, (tile_n // _LANE) * _LANE)
    tile = min(tile, pl.cdiv(N_eff, _LANE) * _LANE)   # always a multiple of 128

    n_tiles = pl.cdiv(N_eff, tile)
    n_cores = 2 if n_tiles >= 2 else 1             # dual-TC lane split (v7x)
    tiles_per_core = pl.cdiv(n_tiles, n_cores)
    n_chunks = tile // _LANE
    unroll = n_chunks if n_chunks <= 16 else 8

    vmem_limit = fixed + 2 * B_eff * tile * (s_lab + s_out) + 4 * 1024 * 1024
    vmem_limit = int(min(max(vmem_limit, 32 * 1024 * 1024), cap))

    # TODO(synk): add a row-block grid axis (tb ~ 256-1024 rows) for very large
    # B_eff so lane tiles never degrade to 128 and vreg pressure stays bounded.

    kernel = functools.partial(
        _mask_dice_kernel, n_eff=N_eff, tile=tile, tiles_per_core=tiles_per_core,
        b_eff=B_eff, n_chunks=n_chunks, unroll=unroll)

    def lane_map(c, j):
        # Clamp out-of-range duplicate tiles (their contribution is lane-masked
        # to zero in-kernel), so no OOB DMA is ever issued.
        return (0, jnp.minimum(c * tiles_per_core + j, n_tiles - 1))

    res = pl.pallas_call(
        kernel,
        out_shape=jax.ShapeDtypeStruct((n_cores, 8, _LANE), jnp.float32),
        grid_spec=pltpu.PrefetchScalarGridSpec(
            num_scalar_prefetch=0,
            grid=(n_cores, tiles_per_core),
            in_specs=[
                pl.BlockSpec((B_eff, 1), lambda c, j: (0, 0)),     # flags (resident)
                pl.BlockSpec((B_eff, tile), lane_map),             # labels lane tile
                pl.BlockSpec((B_eff, tile), lane_map),             # predictions tile
            ],
            out_specs=pl.BlockSpec((1, 8, _LANE), lambda c, j: (c, 0, 0)),
            scratch_shapes=[
                pltpu.VMEM((B_eff, _LANE), jnp.float32),
                pltpu.VMEM((B_eff, _LANE), jnp.float32),
                pltpu.VMEM((B_eff, _LANE), jnp.float32),
            ],
        ),
        compiler_params=pltpu.CompilerParams(
            dimension_semantics=("parallel", "arbitrary"),
            vmem_limit_bytes=vmem_limit),
    )(flag, lab2, out2)

    # Combine per-core partials (unused cores wrote zeros).
    inter = jnp.sum(res[:, 0, 0])
    lsum = jnp.sum(res[:, 0, 1])
    osum = jnp.sum(res[:, 0, 2])
    smooth = 1.0
    dice = (2.0 * inter + smooth) / (lsum + osum + smooth)
    loss = jnp.where(nbsup > 0, 1.0 - dice, jnp.float32(0.0))
    return loss, nbsup


def _reference(out, labels):
    """Pure-JAX reference matching the PyTorch forward."""
    B = out.shape[0]
    out2 = out.reshape(B, -1).astype(jnp.float32)
    lab2 = labels.reshape(B, -1).astype(jnp.float32)
    cond = lab2[:, 0] >= 0
    m = cond.astype(jnp.float32)[:, None]
    nbsup = jnp.sum(cond.astype(jnp.int32))
    inter = jnp.sum(m * lab2 * out2)
    dice = (2.0 * inter + 1.0) / (jnp.sum(m * lab2) + jnp.sum(m * out2) + 1.0)
    loss = jnp.where(nbsup > 0, 1.0 - dice, jnp.float32(0.0))
    return loss, nbsup


if __name__ == "__main__":
    k = jax.random.PRNGKey(0)
    k1, k2, k3, k4, k5, k6 = jax.random.split(k, 6)

    cases = []

    # 1) NCHW predictions, mixed supervision (original harness shapes).
    out1 = jax.nn.sigmoid(jax.random.normal(k1, (2, 4, 16, 16), jnp.float32))
    lab1 = jax.random.bernoulli(k2, 0.5, (2, 1024)).astype(jnp.float32)
    lab1 = lab1.at[0, 0].set(1.0).at[1, 0].set(-1.0)
    cases.append(("nchw_mixed", out1, lab1, None))

    # 2) bf16 predictions kept native in HBM (in-kernel f32 cast), all supervised.
    cases.append(("bf16_out", out1.astype(jnp.bfloat16), lab1.at[1, 0].set(1.0), None))

    # 3) Ragged lane tail (N_eff = 75 < 128); flag == 0 counts as supervised.
    out3 = jax.nn.sigmoid(jax.random.normal(k3, (3, 600), jnp.float32))
    lab3 = jax.random.bernoulli(k4, 0.5, (3, 600)).astype(jnp.float32)
    lab3 = lab3.at[0, 0].set(1.0).at[1, 0].set(-1.0).at[2, 0].set(0.0)
    cases.append(("ragged_tail", out3, lab3, None))

    # 4) Multi-tile + dual-core lane split with a ragged second tile.
    out4 = jax.nn.sigmoid(jax.random.normal(k5, (2, 2040), jnp.float32))
    lab4 = jax.random.bernoulli(k6, 0.5, (2, 2040)).astype(jnp.float32)
    lab4 = lab4.at[0, 0].set(-1.0).at[1, 0].set(1.0)
    cases.append(("dual_core_ragged", out4, lab4, 128))

    # 5) Fully unsupervised batch: loss must be exactly 0, nbsup 0.
    cases.append(("unsupervised", out1, lab1.at[0, 0].set(-1.0).at[1, 0].set(-2.0), None))

    fn = jax.jit(mask_dice_loss, static_argnames=("tile_n",))
    for name, o, l, tn in cases:
        loss, nbsup = fn(o, l, tile_n=tn)
        loss = jax.block_until_ready(loss)
        nbsup = jax.block_until_ready(nbsup)
        ref_loss, ref_nbsup = _reference(o, l)
        assert int(nbsup) == int(ref_nbsup), (name, int(nbsup), int(ref_nbsup))
        assert jnp.allclose(loss, ref_loss, rtol=1e-4, atol=1e-5), (name, loss, ref_loss)

    print("KERNEL_OK")
</pallas_src>

<mosaic_0001>
module attributes {stable_mosaic.version = 11 : i64} {
  func.func @_mask_dice_kernel(%arg0: i32, %arg1: i32, %arg2: memref<16x1xf32, #tpu.memory_space<vmem>>, %arg3: memref<16x128xf32, #tpu.memory_space<vmem>>, %arg4: memref<16x128xf32, #tpu.memory_space<vmem>>, %arg5: memref<1x8x128xf32, #tpu.memory_space<vmem>>, %arg6: memref<16x128xf32, #tpu.memory_space<vmem>>, %arg7: memref<16x128xf32, #tpu.memory_space<vmem>>, %arg8: memref<16x128xf32, #tpu.memory_space<vmem>>) attributes {dimension_semantics = [#tpu.dimension_semantics<parallel>, #tpu.dimension_semantics<arbitrary>], iteration_bounds = array<i64: 1, 1>, scalar_prefetch = 0 : i64, scratch_operands = 3 : i64, tpu.core_type = #tpu.core_type<tc>, window_params = [{pipeline_mode = #tpu.pipeline_mode<synchronous>, transform_indices = @transform_0, window_bounds = array<i64: 16, 1>}, {transform_indices = @transform_1, window_bounds = array<i64: 16, 128>}, {transform_indices = @transform_2, window_bounds = array<i64: 16, 128>}, {transform_indices = @transform_3, window_bounds = array<i64: 1, 8, 128>}]} {
    %c1_i32 = arith.constant 1 : i32
    %0 = arith.muli %arg0, %c1_i32 : i32
    %1 = arith.addi %0, %arg1 : i32
    %c128_i32 = arith.constant 128 : i32
    %2 = arith.muli %1, %c128_i32 : i32
    %c0_i32 = arith.constant 0 : i32
    %3 = arith.cmpi eq, %arg1, %c0_i32 : i32
    %4 = arith.extui %3 : i1 to i32
    %c0_i32_0 = arith.constant 0 : i32
    %5 = arith.cmpi ne, %4, %c0_i32_0 : i32
    scf.if %5 {
      %cst = arith.constant 0.000000e+00 : f32
      %16 = vector.broadcast %cst : f32 to vector<16x128xf32>
      %c0 = arith.constant 0 : index
      %c0_7 = arith.constant 0 : index
      %17 = vector.load %arg6[%c0, %c0_7] : memref<16x128xf32, #tpu.memory_space<vmem>>, vector<16x128xf32>
      tpu.vector_store %arg6[%c0, %c0_7], %16 {strides = array<i32>} : memref<16x128xf32, #tpu.memory_space<vmem>>, vector<16x128xf32>,
      %cst_8 = arith.constant 0.000000e+00 : f32
      %18 = vector.broadcast %cst_8 : f32 to vector<16x128xf32>
      %c0_9 = arith.constant 0 : index
      %c0_10 = arith.constant 0 : index
      %19 = vector.load %arg7[%c0_9, %c0_10] : memref<16x128xf32, #tpu.memory_space<vmem>>, vector<16x128xf32>
      tpu.vector_store %arg7[%c0_9, %c0_10], %18 {strides = array<i32>} : memref<16x128xf32, #tpu.memory_space<vmem>>, vector<16x128xf32>,
      %cst_11 = arith.constant 0.000000e+00 : f32
      %20 = vector.broadcast %cst_11 : f32 to vector<16x128xf32>
      %c0_12 = arith.constant 0 : index
      %c0_13 = arith.constant 0 : index
      %21 = vector.load %arg8[%c0_12, %c0_13] : memref<16x128xf32, #tpu.memory_space<vmem>>, vector<16x128xf32>
      tpu.vector_store %arg8[%c0_12, %c0_13], %20 {strides = array<i32>} : memref<16x128xf32, #tpu.memory_space<vmem>>, vector<16x128xf32>,
    } else {
    }
    %c128_i32_1 = arith.constant 128 : i32
    %6 = arith.addi %2, %c128_i32_1 : i32
    %c128_i32_2 = arith.constant 128 : i32
    %7 = arith.cmpi sle, %6, %c128_i32_2 : i32
    %8 = arith.extui %7 : i1 to i32
    %c0_i32_3 = arith.constant 0 : i32
    %9 = arith.cmpi ne, %8, %c0_i32_3 : i32
    scf.if %9 {
      %cst = arith.constant 0.000000e+00 : f32
      %16 = vector.broadcast %cst : f32 to vector<16x128xf32>
      %c0_i32_7 = arith.constant 0 : i32
      %c128_i32_8 = arith.constant 128 : i32
      %17 = arith.muli %c0_i32_7, %c128_i32_8 : i32
      %18 = tpu.assume_multiple %17, 128 : i32
      %c0 = arith.constant 0 : index
      %19 = arith.index_cast %18 : i32 to index
      %20 = vector.load %arg3[%c0, %19] : memref<16x128xf32, #tpu.memory_space<vmem>>, vector<16x128xf32>
      %c0_9 = arith.constant 0 : index
      %21 = arith.index_cast %18 : i32 to index
      %22 = vector.load %arg4[%c0_9, %21] : memref<16x128xf32, #tpu.memory_space<vmem>>, vector<16x128xf32>
      %23 = arith.mulf %20, %22 : vector<16x128xf32>
      %24 = arith.addf %16, %23 : vector<16x128xf32>
      %25 = arith.addf %16, %20 : vector<16x128xf32>
      %26 = arith.addf %16, %22 : vector<16x128xf32>
      %c1_i32_10 = arith.constant 1 : i32
      %c0_11 = arith.constant 0 : index
      %c0_12 = arith.constant 0 : index
      %27 = vector.load %arg6[%c0_11, %c0_12] : memref<16x128xf32, #tpu.memory_space<vmem>>, vector<16x128xf32>
      %28 = arith.addf %27, %24 : vector<16x128xf32>
      %c0_13 = arith.constant 0 : index
      %c0_14 = arith.constant 0 : index
      %29 = vector.load %arg6[%c0_13, %c0_14] : memref<16x128xf32, #tpu.memory_space<vmem>>, vector<16x128xf32>
      tpu.vector_store %arg6[%c0_13, %c0_14], %28 {strides = array<i32>} : memref<16x128xf32, #tpu.memory_space<vmem>>, vector<16x128xf32>,
      %c0_15 = arith.constant 0 : index
      %c0_16 = arith.constant 0 : index
      %30 = vector.load %arg7[%c0_15, %c0_16] : memref<16x128xf32, #tpu.memory_space<vmem>>, vector<16x128xf32>
      %31 = arith.addf %30, %25 : vector<16x128xf32>
      %c0_17 = arith.constant 0 : index
      %c0_18 = arith.constant 0 : index
      %32 = vector.load %arg7[%c0_17, %c0_18] : memref<16x128xf32, #tpu.memory_space<vmem>>, vector<16x128xf32>
      tpu.vector_store %arg7[%c0_17, %c0_18], %31 {strides = array<i32>} : memref<16x128xf32, #tpu.memory_space<vmem>>, vector<16x128xf32>,
      %c0_19 = arith.constant 0 : index
      %c0_20 = arith.constant 0 : index
      %33 = vector.load %arg8[%c0_19, %c0_20] : memref<16x128xf32, #tpu.memory_space<vmem>>, vector<16x128xf32>
      %34 = arith.addf %33, %26 : vector<16x128xf32>
      %c0_21 = arith.constant 0 : index
      %c0_22 = arith.constant 0 : index
      %35 = vector.load %arg8[%c0_21, %c0_22] : memref<16x128xf32, #tpu.memory_space<vmem>>, vector<16x128xf32>
      tpu.vector_store %arg8[%c0_21, %c0_22], %34 {strides = array<i32>} : memref<16x128xf32, #tpu.memory_space<vmem>>, vector<16x128xf32>,
    } else {
    }
    %true = arith.constant true
    %10 = arith.xori %7, %true : i1
    %11 = arith.extui %10 : i1 to i32
    %c0_i32_4 = arith.constant 0 : i32
    %12 = arith.cmpi ne, %11, %c0_i32_4 : i32
    scf.if %12 {
      %cst = arith.constant 0.000000e+00 : f32
      %16 = vector.broadcast %cst : f32 to vector<16x128xf32>
      %c0_i32_7 = arith.constant 0 : i32
      %c128_i32_8 = arith.constant 128 : i32
      %17 = arith.muli %c0_i32_7, %c128_i32_8 : i32
      %18 = tpu.assume_multiple %17, 128 : i32
      %c0 = arith.constant 0 : index
      %19 = arith.index_cast %18 : i32 to index
      %20 = vector.load %arg3[%c0, %19] : memref<16x128xf32, #tpu.memory_space<vmem>>, vector<16x128xf32>
      %c0_9 = arith.constant 0 : index
      %21 = arith.index_cast %18 : i32 to index
      %22 = vector.load %arg4[%c0_9, %21] : memref<16x128xf32, #tpu.memory_space<vmem>>, vector<16x128xf32>
      %23 = tpu.iota {dimensions = array<i32: 1>} : vector<1x128xi32>
      %c128_i32_10 = arith.constant 128 : i32
      %24 = arith.muli %c0_i32_7, %c128_i32_10 : i32
      %25 = arith.addi %2, %24 : i32
      %26 = vector.broadcast %25 : i32 to vector<1x128xi32>
      %27 = arith.addi %26, %23 : vector<1x128xi32>
      %c128_i32_11 = arith.constant 128 : i32
      %28 = vector.broadcast %c128_i32_11 : i32 to vector<1x128xi32>
      %29 = arith.cmpi slt, %27, %28 : vector<1x128xi32>
      %cst_12 = arith.constant 0.000000e+00 : f32
      %30 = vector.shape_cast %29 : vector<1x128xi1> to vector<1x128xi1>
      %31 = vector.broadcast %30 : vector<1x128xi1> to vector<16x128xi1>
      %32 = vector.broadcast %cst_12 : f32 to vector<16x128xf32>
      %33 = arith.select %31, %20, %32 : vector<16x128xi1>, vector<16x128xf32>
      %cst_13 = arith.constant 0.000000e+00 : f32
      %34 = vector.shape_cast %29 : vector<1x128xi1> to vector<1x128xi1>
      %35 = vector.broadcast %34 : vector<1x128xi1> to vector<16x128xi1>
      %36 = vector.broadcast %cst_13 : f32 to vector<16x128xf32>
      %37 = arith.select %35, %22, %36 : vector<16x128xi1>, vector<16x128xf32>
      %38 = arith.mulf %33, %37 : vector<16x128xf32>
      %39 = arith.addf %16, %38 : vector<16x128xf32>
      %40 = arith.addf %16, %33 : vector<16x128xf32>
      %41 = arith.addf %16, %37 : vector<16x128xf32>
      %c1_i32_14 = arith.constant 1 : i32
      %c0_15 = arith.constant 0 : index
      %c0_16 = arith.constant 0 : index
      %42 = vector.load %arg6[%c0_15, %c0_16] : memref<16x128xf32, #tpu.memory_space<vmem>>, vector<16x128xf32>
      %43 = arith.addf %42, %39 : vector<16x128xf32>
      %c0_17 = arith.constant 0 : index
      %c0_18 = arith.constant 0 : index
      %44 = vector.load %arg6[%c0_17, %c0_18] : memref<16x128xf32, #tpu.memory_space<vmem>>, vector<16x128xf32>
      tpu.vector_store %arg6[%c0_17, %c0_18], %43 {strides = array<i32>} : memref<16x128xf32, #tpu.memory_space<vmem>>, vector<16x128xf32>,
      %c0_19 = arith.constant 0 : index
      %c0_20 = arith.constant 0 : index
      %45 = vector.load %arg7[%c0_19, %c0_20] : memref<16x128xf32, #tpu.memory_space<vmem>>, vector<16x128xf32>
      %46 = arith.addf %45, %40 : vector<16x128xf32>
      %c0_21 = arith.constant 0 : index
      %c0_22 = arith.constant 0 : index
      %47 = vector.load %arg7[%c0_21, %c0_22] : memref<16x128xf32, #tpu.memory_space<vmem>>, vector<16x128xf32>
      tpu.vector_store %arg7[%c0_21, %c0_22], %46 {strides = array<i32>} : memref<16x128xf32, #tpu.memory_space<vmem>>, vector<16x128xf32>,
      %c0_23 = arith.constant 0 : index
      %c0_24 = arith.constant 0 : index
      %48 = vector.load %arg8[%c0_23, %c0_24] : memref<16x128xf32, #tpu.memory_space<vmem>>, vector<16x128xf32>
      %49 = arith.addf %48, %41 : vector<16x128xf32>
      %c0_25 = arith.constant 0 : index
      %c0_26 = arith.constant 0 : index
      %50 = vector.load %arg8[%c0_25, %c0_26] : memref<16x128xf32, #tpu.memory_space<vmem>>, vector<16x128xf32>
      tpu.vector_store %arg8[%c0_25, %c0_26], %49 {strides = array<i32>} : memref<16x128xf32, #tpu.memory_space<vmem>>, vector<16x128xf32>,
    } else {
    }
    %c0_i32_5 = arith.constant 0 : i32
    %13 = arith.cmpi eq, %arg1, %c0_i32_5 : i32
    %14 = arith.extui %13 : i1 to i32
    %c0_i32_6 = arith.constant 0 : i32
    %15 = arith.cmpi ne, %14, %c0_i32_6 : i32
    scf.if %15 {
      %c0 = arith.constant 0 : index
      %c0_7 = arith.constant 0 : index
      %16 = vector.load %arg2[%c0, %c0_7] : memref<16x1xf32, #tpu.memory_space<vmem>>, vector<16x1xf32>
      %cst = arith.constant 0.000000e+00 : f32
      %17 = vector.broadcast %cst : f32 to vector<16x1xf32>
      %18 = arith.cmpf oge, %16, %17 : vector<16x1xf32>
      %19 = arith.extui %18 : vector<16x1xi1> to vector<16x1xi32>
      %20 = arith.sitofp %19 : vector<16x1xi32> to vector<16x1xf32>
      %c0_8 = arith.constant 0 : index
      %c0_9 = arith.constant 0 : index
      %21 = vector.load %arg6[%c0_8, %c0_9] : memref<16x128xf32, #tpu.memory_space<vmem>>, vector<16x128xf32>
      %22 = vector.broadcast %20 : vector<16x1xf32> to vector<16x128xf32>
      %23 = arith.mulf %22, %21 : vector<16x128xf32>
      %24 = vector.shape_cast %23 : vector<16x128xf32> to vector<1x16x128xf32>
      %cst_10 = arith.constant dense<0.000000e+00> : vector<1xf32>
      %25 = vector.multi_reduction <add>, %24, %cst_10 [1, 2] : vector<1x16x128xf32> to vector<1xf32>
      %26 = vector.shape_cast %25 : vector<1xf32> to vector<1x1x1xf32>
      %27 = vector.extract %26[0, 0, 0] : f32 from vector<1x1x1xf32>
      %c0_11 = arith.constant 0 : index
      %c0_12 = arith.constant 0 : index
      %28 = vector.load %arg7[%c0_11, %c0_12] : memref<16x128xf32, #tpu.memory_space<vmem>>, vector<16x128xf32>
      %29 = vector.broadcast %20 : vector<16x1xf32> to vector<16x128xf32>
      %30 = arith.mulf %29, %28 : vector<16x128xf32>
      %31 = vector.shape_cast %30 : vector<16x128xf32> to vector<1x16x128xf32>
      %cst_13 = arith.constant dense<0.000000e+00> : vector<1xf32>
      %32 = vector.multi_reduction <add>, %31, %cst_13 [1, 2] : vector<1x16x128xf32> to vector<1xf32>
      %33 = vector.shape_cast %32 : vector<1xf32> to vector<1x1x1xf32>
      %34 = vector.extract %33[0, 0, 0] : f32 from vector<1x1x1xf32>
      %c0_14 = arith.constant 0 : index
      %c0_15 = arith.constant 0 : index
      %35 = vector.load %arg8[%c0_14, %c0_15] : memref<16x128xf32, #tpu.memory_space<vmem>>, vector<16x128xf32>
      %36 = vector.broadcast %20 : vector<16x1xf32> to vector<16x128xf32>
      %37 = arith.mulf %36, %35 : vector<16x128xf32>
      %38 = vector.shape_cast %37 : vector<16x128xf32> to vector<1x16x128xf32>
      %cst_16 = arith.constant dense<0.000000e+00> : vector<1xf32>
      %39 = vector.multi_reduction <add>, %38, %cst_16 [1, 2] : vector<1x16x128xf32> to vector<1xf32>
      %40 = vector.shape_cast %39 : vector<1xf32> to vector<1x1x1xf32>
      %41 = vector.extract %40[0, 0, 0] : f32 from vector<1x1x1xf32>
      %42 = tpu.iota {dimensions = array<i32: 2>} : vector<1x8x128xi32>
      %c0_i32_17 = arith.constant 0 : i32
      %43 = vector.broadcast %c0_i32_17 : i32 to vector<1x8x128xi32>
      %44 = arith.cmpi eq, %42, %43 : vector<1x8x128xi32>
      %cst_18 = arith.constant 0.000000e+00 : f32
      %45 = vector.broadcast %27 : f32 to vector<1x8x128xf32>
      %46 = vector.broadcast %cst_18 : f32 to vector<1x8x128xf32>
      %47 = arith.select %44, %45, %46 : vector<1x8x128xi1>, vector<1x8x128xf32>
      %c1_i32_19 = arith.constant 1 : i32
      %48 = vector.broadcast %c1_i32_19 : i32 to vector<1x8x128xi32>
      %49 = arith.cmpi eq, %42, %48 : vector<1x8x128xi32>
      %cst_20 = arith.constant 0.000000e+00 : f32
      %50 = vector.broadcast %34 : f32 to vector<1x8x128xf32>
      %51 = vector.broadcast %cst_20 : f32 to vector<1x8x128xf32>
      %52 = arith.select %49, %50, %51 : vector<1x8x128xi1>, vector<1x8x128xf32>
      %53 = arith.addf %47, %52 : vector<1x8x128xf32>
      %c2_i32 = arith.constant 2 : i32
      %54 = vector.broadcast %c2_i32 : i32 to vector<1x8x128xi32>
      %55 = arith.cmpi eq, %42, %54 : vector<1x8x128xi32>
      %cst_21 = arith.constant 0.000000e+00 : f32
      %56 = vector.broadcast %41 : f32 to vector<1x8x128xf32>
      %57 = vector.broadcast %cst_21 : f32 to vector<1x8x128xf32>
      %58 = arith.select %55, %56, %57 : vector<1x8x128xi1>, vector<1x8x128xf32>
      %59 = arith.addf %53, %58 : vector<1x8x128xf32>
      %c0_22 = arith.constant 0 : index
      %c0_23 = arith.constant 0 : index
      %c0_24 = arith.constant 0 : index
      %60 = vector.load %arg5[%c0_22, %c0_23, %c0_24] : memref<1x8x128xf32, #tpu.memory_space<vmem>>, vector<1x8x128xf32>
      tpu.vector_store %arg5[%c0_22, %c0_23, %c0_24], %59 {strides = array<i32>} : memref<1x8x128xf32, #tpu.memory_space<vmem>>, vector<1x8x128xf32>,
    } else {
    }
    return
  }
  func.func @transform_0(%arg0: i32, %arg1: i32) -> (i32, i32) {
    %c0_i32 = arith.constant 0 : i32
    %c0_i32_0 = arith.constant 0 : i32
    %c0_i32_1 = arith.constant 0 : i32
    return %c0_i32, %c0_i32_0 : i32, i32
  }
  func.func @transform_1(%arg0: i32, %arg1: i32) -> (i32, i32) {
    %c1_i32 = arith.constant 1 : i32
    %0 = arith.muli %arg0, %c1_i32 : i32
    %1 = arith.addi %0, %arg1 : i32
    %c0_i32 = arith.constant 0 : i32
    %2 = arith.minsi %1, %c0_i32 : i32
    %c0_i32_0 = arith.constant 0 : i32
    %c0_i32_1 = arith.constant 0 : i32
    return %c0_i32_0, %2 : i32, i32
  }
  func.func @transform_2(%arg0: i32, %arg1: i32) -> (i32, i32) {
    %c1_i32 = arith.constant 1 : i32
    %0 = arith.muli %arg0, %c1_i32 : i32
    %1 = arith.addi %0, %arg1 : i32
    %c0_i32 = arith.constant 0 : i32
    %2 = arith.minsi %1, %c0_i32 : i32
    %c0_i32_0 = arith.constant 0 : i32
    %c0_i32_1 = arith.constant 0 : i32
    return %c0_i32_0, %2 : i32, i32
  }
  func.func @transform_3(%arg0: i32, %arg1: i32) -> (i32, i32, i32) {
    %c0_i32 = arith.constant 0 : i32
    %c0_i32_0 = arith.constant 0 : i32
    %c0_i32_1 = arith.constant 0 : i32
    return %arg0, %c0_i32, %c0_i32_0 : i32, i32, i32
  }
}

</mosaic_0001>

<llo_original>
// kernel: mask_dice_loss.1
$region0: #{mask_dice_loss.1}
  #allocation0 [shape = 'u32[]', space=smem, size = 0x4, offset = 0x4, fixed_abs, tag = 'smem constant byte address 0x4 - core index']
  #allocation1 [shape = 'u32[144,128]{1,0:T(1,128)}', space=vmem, size = 0x12000, scoped, tag = 'internal scratch']
  #allocation2 [shape = 'f32[16,128]{1,0:T(8,128)}', space=vmem, size = 0x2000, scoped, tag = 'scratch operand']
  #allocation3 [shape = 'f32[16,128]{1,0:T(8,128)}', space=vmem, size = 0x2000, scoped, tag = 'scratch operand']
  #allocation4 [shape = 'f32[16,128]{1,0:T(8,128)}', space=vmem, size = 0x2000, scoped, tag = 'scratch operand']
  %s0 = inlined_call_operand.vmem [shape: f32[16,1], index: 0, kind: input, shape index: {}]
  %s1 = inlined_call_operand.vmem [shape: f32[16,128], index: 1, kind: input, shape index: {}]
  %s2 = inlined_call_operand.vmem [shape: f32[16,128], index: 2, kind: input, shape index: {}]
  %s3 = inlined_call_operand.vmem [shape: f32[1,8,128], index: 3, kind: output, shape index: {}]
  %s4 = sld [smem:[#allocation0]]
  $region38: #{mask_dice_loss.1} parent=0
    _
  %s6 = ssub.s32 1, %s4
  %s7 = scalar_select 0, %s6, %s4
  // Predicated region
  $region2: #{mask_dice_loss.1} parent=0 // pred_check
    _
  $region3: #{mask_dice_loss.1} parent=0 // pred_check_branch
    %9 = sbr.rel (0) target = $region5
  $region4: #{mask_dice_loss.1} parent=0 // pred_region
    _
  $region5: #{mask_dice_loss.1} parent=0 // pred_fallthru
    _
  // Predicated region
  $region6: #{mask_dice_loss.1} parent=0 // pred_check
    _
  $region7: #{mask_dice_loss.1} parent=0 // pred_check_branch
    %11 = sbr.rel (0) target = $region9
  $region8: #{mask_dice_loss.1} parent=0 // pred_region
    %s12 = sadd.s32 0, 0
    %p13 = scmp.lt.s32.totalorder %s12, 0
    %s14 = scalar_select %p13, %s12, 0
    %p15 = scmp.lt.s32.totalorder %s14, 0
    %s16 = scalar_select %p15, %s14, 0
    %s17 = smul.addr %s16, 8
    %s18 = scalar_lea.vmem %s1, %s17
    %s19 = sadd.s32 0, 0
    %p20 = scmp.lt.s32.totalorder %s19, 0
    %s21 = scalar_select %p20, %s19, 0
  $region9: #{mask_dice_loss.1} parent=0 // pred_fallthru
    _
  // Predicated region
  $region10: #{mask_dice_loss.1} parent=0 // pred_check
    _
  $region11: #{mask_dice_loss.1} parent=0 // pred_check_branch
    %23 = sbr.rel (0) target = $region13
  $region12: #{mask_dice_loss.1} parent=0 // pred_region
    %s24 = sadd.s32 0, 0
    %p25 = scmp.lt.s32.totalorder %s24, 0
    %s26 = scalar_select %p25, %s24, 0
    %p27 = scmp.lt.s32.totalorder %s26, 0
    %s28 = scalar_select %p27, %s26, 0
    %s29 = smul.addr %s28, 8
    %s30 = scalar_lea.vmem %s2, %s29
    %s31 = sadd.s32 0, 0
    %p32 = scmp.lt.s32.totalorder %s31, 0
    %s33 = scalar_select %p32, %s31, 0
  $region13: #{mask_dice_loss.1} parent=0 // pred_fallthru
    _
  %s34 = sadd.s32 0, 0
  %p35 = scmp.lt.s32.totalorder %s34, 0
  %s36 = scalar_select %p35, %s34, 0
  %p37 = scmp.lt.s32.totalorder %s36, 0
  %s38 = scalar_select %p37, %s36, 0
  %s39 = smul.addr %s38, 8
  %s40 = scalar_lea.vmem %s1, %s39
  %s41 = sadd.s32 0, 0
  %p42 = scmp.lt.s32.totalorder %s41, 0
  %s43 = scalar_select %p42, %s41, 0
  %p44 = scmp.lt.s32.totalorder %s43, 0
  %s45 = scalar_select %p44, %s43, 0
  %s46 = smul.addr %s45, 8
  %s47 = scalar_lea.vmem %s2, %s46
  %s48 = sadd.s32 0, 0
  %p49 = scmp.lt.s32.totalorder %s48, 0
  %s50 = scalar_select %p49, %s48, 0
  %p51 = scmp.lt.s32.totalorder %s50, 0
  %s52 = scalar_select %p51, %s50, 0
  %s53 = smul.addr %s52, 8
  %s54 = scalar_lea.vmem %s1, %s53
  %s55 = sadd.s32 0, 0
  %p56 = scmp.lt.s32.totalorder %s55, 0
  %s57 = scalar_select %p56, %s55, 0
  %s58 = sadd.s32 0, 0
  %p59 = scmp.lt.s32.totalorder %s58, 0
  %s60 = scalar_select %p59, %s58, 0
  %p61 = scmp.lt.s32.totalorder %s60, 0
  %s62 = scalar_select %p61, %s60, 0
  %s63 = smul.addr %s62, 8
  %s64 = scalar_lea.vmem %s2, %s63
  %s65 = sadd.s32 0, 0
  %p66 = scmp.lt.s32.totalorder %s65, 0
  %s67 = scalar_select %p66, %s65, 0
  %s68 = sadd.s32 0, 0
  %s69 = smul.u32 %s68, 128
  %p70 = scmp.eq.s32.totalorder 0, 0
  // Predicated region
  $region14: #{mask_dice_loss.1} parent=0 // pred_check
    %p71 = pneg %p70
  $region15: #{mask_dice_loss.1} parent=0 // pred_check_branch
    %73 = sbr.rel (%p71) target = $region17
  $region16: #{mask_dice_loss.1} parent=0 // pred_region
    %74 = vst [vmem:[#allocation2] sm:$0xff] 0.0
    %75 = vst [vmem:[#allocation2 + $0x8] sm:$0xff] 0.0
    %76 = vst [vmem:[#allocation3] sm:$0xff] 0.0
    %77 = vst [vmem:[#allocation3 + $0x8] sm:$0xff] 0.0
    %78 = vst [vmem:[#allocation4] sm:$0xff] 0.0
    %79 = vst [vmem:[#allocation4 + $0x8] sm:$0xff] 0.0
  $region17: #{mask_dice_loss.1} parent=0 // pred_fallthru
    _
  %s80 = sadd.s32 %s69, 128
  %p81 = scmp.le.s32.totalorder %s80, 128
  // Predicated region
  $region18: #{mask_dice_loss.1} parent=0 // pred_check
    %p82 = pneg %p81
  $region19: #{mask_dice_loss.1} parent=0 // pred_check_branch
    %84 = sbr.rel (%p82) target = $region21
  $region20: #{mask_dice_loss.1} parent=0 // pred_region
    %v85 = vld [vmem:[%s54] sm:$0xff]
    %v86 = vld [vmem:[%s54 + $0x8] sm:$0xff]
    %v87 = vld [vmem:[%s64] sm:$0xff]
    %v88 = vld [vmem:[%s64 + $0x8] sm:$0xff]
    %v89 = vmul.f32 %v85, %v87
    %v90 = vmul.f32 %v86, %v88
    %v91 = vadd.f32 %v89, 0.0
    %v92 = vadd.f32 %v90, 0.0
    %v93 = vadd.f32 %v85, 0.0
    %v94 = vadd.f32 %v86, 0.0
    %v95 = vadd.f32 %v87, 0.0
    %v96 = vadd.f32 %v88, 0.0
    %v97 = vld [vmem:[#allocation2] sm:$0xff]
    %v98 = vld [vmem:[#allocation2 + $0x8] sm:$0xff]
    %v99 = vadd.f32 %v97, %v91
    %v100 = vadd.f32 %v98, %v92
    %101 = vst [vmem:[#allocation2] sm:$0xff] %v99
    %102 = vst [vmem:[#allocation2 + $0x8] sm:$0xff] %v100
    %v103 = vld [vmem:[#allocation3] sm:$0xff]
    %v104 = vld [vmem:[#allocation3 + $0x8] sm:$0xff]
    %v105 = vadd.f32 %v103, %v93
    %v106 = vadd.f32 %v104, %v94
    %107 = vst [vmem:[#allocation3] sm:$0xff] %v105
    %108 = vst [vmem:[#allocation3 + $0x8] sm:$0xff] %v106
    %v109 = vld [vmem:[#allocation4] sm:$0xff]
    %v110 = vld [vmem:[#allocation4 + $0x8] sm:$0xff]
    %v111 = vadd.f32 %v109, %v95
    %v112 = vadd.f32 %v110, %v96
    %113 = vst [vmem:[#allocation4] sm:$0xff] %v111
    %114 = vst [vmem:[#allocation4 + $0x8] sm:$0xff] %v112
  $region21: #{mask_dice_loss.1} parent=0 // pred_fallthru
    _
  %p115 = scmp.gt.s32.totalorder %s80, 128
  // Predicated region
  $region22: #{mask_dice_loss.1} parent=0 // pred_check
    %p116 = pneg %p115
  $region23: #{mask_dice_loss.1} parent=0 // pred_check_branch
    %118 = sbr.rel (%p116) target = $region25
  $region24: #{mask_dice_loss.1} parent=0 // pred_region
    %v119 = vld [vmem:[%s54] sm:$0xff]
    %v120 = vld [vmem:[%s54 + $0x8] sm:$0xff]
    %v121 = vld [vmem:[%s64] sm:$0xff]
    %v122 = vld [vmem:[%s64 + $0x8] sm:$0xff]
    %v123 = vlaneseq
    %v124 = vand.u32 %v123, 127
    %v125 = vstv %s69
    %v126 = vadd.s32 %v125, %v124
    %vm127 = vcmp.lt.s32.totalorder %v126, 128
    %v128 = vsel %vm127, 1, 0
    %vm129 = vcmp.eq.s32.totalorder %v128, 1
    %v130 = vsel %vm129, %v119, 0.0
    %v131 = vsel %vm129, %v120, 0.0
    %v132 = vsel %vm129, %v121, 0.0
    %v133 = vsel %vm129, %v122, 0.0
    %v134 = vmul.f32 %v130, %v132
    %v135 = vmul.f32 %v131, %v133
    %v136 = vadd.f32 %v134, 0.0
    %v137 = vadd.f32 %v135, 0.0
    %v138 = vadd.f32 %v130, 0.0
    %v139 = vadd.f32 %v131, 0.0
    %v140 = vadd.f32 %v132, 0.0
    %v141 = vadd.f32 %v133, 0.0
    %v142 = vld [vmem:[#allocation2] sm:$0xff]
    %v143 = vld [vmem:[#allocation2 + $0x8] sm:$0xff]
    %v144 = vadd.f32 %v142, %v136
    %v145 = vadd.f32 %v143, %v137
    %146 = vst [vmem:[#allocation2] sm:$0xff] %v144
    %147 = vst [vmem:[#allocation2 + $0x8] sm:$0xff] %v145
    %v148 = vld [vmem:[#allocation3] sm:$0xff]
    %v149 = vld [vmem:[#allocation3 + $0x8] sm:$0xff]
    %v150 = vadd.f32 %v148, %v138
    %v151 = vadd.f32 %v149, %v139
    %152 = vst [vmem:[#allocation3] sm:$0xff] %v150
    %153 = vst [vmem:[#allocation3 + $0x8] sm:$0xff] %v151
    %v154 = vld [vmem:[#allocation4] sm:$0xff]
    %v155 = vld [vmem:[#allocation4 + $0x8] sm:$0xff]
    %v156 = vadd.f32 %v154, %v140
    %v157 = vadd.f32 %v155, %v141
    %158 = vst [vmem:[#allocation4] sm:$0xff] %v156
    %159 = vst [vmem:[#allocation4 + $0x8] sm:$0xff] %v157
  $region25: #{mask_dice_loss.1} parent=0 // pred_fallthru
    _
  // Predicated region
  $region26: #{mask_dice_loss.1} parent=0 // pred_check
    %p160 = pneg %p70
  $region27: #{mask_dice_loss.1} parent=0 // pred_check_branch
    %162 = sbr.rel (%p160) target = $region29
  $region28: #{mask_dice_loss.1} parent=0 // pred_region
    %v163 = vld [vmem:[%s0] sm:$0xff]
    %v164 = vld [vmem:[%s0 + $0x8] sm:$0xff]
    %vm165 = vcmp.ge.f32.partialorder %v163, 0.0
    %vm166 = vcmp.ge.f32.partialorder %v164, 0.0
    %v167 = vsel %vm165, 1, 0
    %v168 = vsel %vm166, 1, 0
    %v169 = vcvt.s32.f32 %v167
    %v170 = vcvt.s32.f32 %v168
    %v171 = vld [vmem:[#allocation2] sm:$0xff]
    %v172 = vld [vmem:[#allocation2 + $0x8] sm:$0xff]
    %174 = vset.pattern.permute.xlu0 0
    %175 = vperm.xlu0 %174, %v169
    %v176 = vpop.permute.xlu0 %175
    %179 = vset.pattern.permute.xlu0 0
    %180 = vperm.xlu0 %179, %v170
    %v181 = vpop.permute.xlu0 %180
    %v183 = vmul.f32 %v176, %v171
    %v184 = vmul.f32 %v181, %v172
    %v185 = vadd.f32 %v183, %v184
    %186 = vadd.xlane.f32.xlu0 %v185
    %v187 = vpop.xlane.xlu0 %186
    %v188 = vrot.slane %v187, 4
    %v189 = vadd.f32 %v187, %v188
    %v190 = vrot.slane %v189, 2
    %v191 = vadd.f32 %v189, %v190
    %v192 = vrot.slane %v191, 1
    %v193 = vadd.f32 %v191, %v192
    %s194 = vtos %v193
    %v195 = vld [vmem:[#allocation3] sm:$0xff]
    %v196 = vld [vmem:[#allocation3 + $0x8] sm:$0xff]
    %v197 = vmul.f32 %v176, %v195
    %v198 = vmul.f32 %v181, %v196
    %v199 = vadd.f32 %v197, %v198
    %200 = vadd.xlane.f32.xlu0 %v199
    %v201 = vpop.xlane.xlu0 %200
    %v202 = vrot.slane %v201, 4
    %v203 = vadd.f32 %v201, %v202
    %v204 = vrot.slane %v203, 2
    %v205 = vadd.f32 %v203, %v204
    %v206 = vrot.slane %v205, 1
    %v207 = vadd.f32 %v205, %v206
    %s208 = vtos %v207
    %v209 = vld [vmem:[#allocation4] sm:$0xff]
    %v210 = vld [vmem:[#allocation4 + $0x8] sm:$0xff]
    %v211 = vmul.f32 %v176, %v209
    %v212 = vmul.f32 %v181, %v210
    %v213 = vadd.f32 %v211, %v212
    %214 = vadd.xlane.f32.xlu0 %v213
    %v215 = vpop.xlane.xlu0 %214
    %v216 = vrot.slane %v215, 4
    %v217 = vadd.f32 %v215, %v216
    %v218 = vrot.slane %v217, 2
    %v219 = vadd.f32 %v217, %v218
    %v220 = vrot.slane %v219, 1
    %v221 = vadd.f32 %v219, %v220
    %s222 = vtos %v221
    %v223 = vlaneseq
    %v224 = vand.u32 %v223, 127
    %vm225 = vcmp.eq.s32.totalorder %v224, 0
    %v226 = vstv %s194
    %v227 = vsel %vm225, %v226, 0.0
    %vm228 = vcmp.eq.s32.totalorder %v224, 1
    %v229 = vstv %s208
    %v230 = vsel %vm228, %v229, 0.0
    %v231 = vadd.f32 %v227, %v230
    %vm232 = vcmp.eq.s32.totalorder %v224, 2
    %v233 = vstv %s222
    %v234 = vsel %vm232, %v233, 0.0
    %v235 = vadd.f32 %v231, %v234
    %236 = vst [vmem:[%s3] sm:$0xff] %v235
  $region29: #{mask_dice_loss.1} parent=0 // pred_fallthru
    _
  // Predicated region
  $region30: #{mask_dice_loss.1} parent=0 // pred_check
    _
  $region31: #{mask_dice_loss.1} parent=0 // pred_check_branch
    %238 = sbr.rel (0) target = $region33
  $region32: #{mask_dice_loss.1} parent=0 // pred_region
    _
  $region33: #{mask_dice_loss.1} parent=0 // pred_fallthru
    _
  // Predicated region
  $region34: #{mask_dice_loss.1} parent=0 // pred_check
    _
  $region35: #{mask_dice_loss.1} parent=0 // pred_check_branch
    %240 = sbr.rel (0) target = $region37
  $region36: #{mask_dice_loss.1} parent=0 // pred_region
    _
  $region37: #{mask_dice_loss.1} parent=0 // pred_fallthru
    _

</llo_original>
